<compile_context>
chip_gen: v7x
topology: tpu7x:2x2x1
jax: 0.10.0
libtpu: 0.0.40
codegen_flags: <defaults>
</compile_context>

<pallas_src>
import functools

import jax
import jax.numpy as jnp
from jax import lax
from jax.experimental import pallas as pl
from jax.experimental.pallas import tpu as pltpu

_LANE = 128                      # each head output occupies one 128-wide slab
_NEG_INF = -1e30                 # bias for padded classifier columns
_VMEM_LIMIT = 48 * 1024 * 1024   # < v7x 64 MiB physical; > v5e 16 MiB default


# ---------------------------------------------------------------------------
# Backbone surrogate: 1x1 conv -> ReLU -> global average pool.
# ---------------------------------------------------------------------------
def _backbone_kernel(x_ref, w_ref, b_ref, feat_ref, *, inv_pool):
    """Grid = (B, n_spatial_tiles); spatial axis is the (inner) reduction axis.

    x_ref    : (C, tp)  channels on sublanes, spatial positions on lanes
    w_ref    : (C, F)
    b_ref    : (1, F)
    feat_ref : (1, F)   resident output block == per-batch pooled accumulator
    """
    p = pl.program_id(1)

    @pl.when(p == 0)
    def _init():
        feat_ref[...] = jnp.zeros_like(feat_ref)

    # 1x1 conv as a matmul contracting the channel (sublane) axis -> (tp, F).
    y = lax.dot_general(x_ref[...], w_ref[...], (((0,), (0,)), ((), ())),
                        preferred_element_type=jnp.float32)
    y = jnp.maximum(y + b_ref[...], 0.0)
    # TODO(synk): if a bundle dump shows the XLU slot binding, do this pooling
    # as ones(1, tp) @ y on the MXU instead of a sublane reduce.
    feat_ref[...] += jnp.sum(y, axis=0, keepdims=True)

    @pl.when(p == pl.num_programs(1) - 1)
    def _finalize():
        feat_ref[...] *= inv_pool


# ---------------------------------------------------------------------------
# ASN-U head (single grid step).
# ---------------------------------------------------------------------------
def _softmax_rows(x):
    m = jnp.max(x, axis=1, keepdims=True)
    e = jnp.exp(x - m)
    return e / jnp.sum(e, axis=1, keepdims=True)


def _head_kernel(feat_ref, wtT_ref, wt_ref, bt_ref,
                 wsT_ref, ws_ref, bs_ref,
                 wpT_ref, bp_ref, out_ref):
    feats = feat_ref[...]                                          # (B, F)

    # target branch
    tlog = jnp.dot(feats, wtT_ref[...],
                   preferred_element_type=jnp.float32) + bt_ref[...]
    tprobs = _softmax_rows(tlog)                                   # pad cols -> 0
    # sum_b(probs @ W) == (sum_b probs) @ W  (row-padded W, no transposes)
    w_t = jnp.dot(jnp.sum(tprobs, axis=0, keepdims=True), wt_ref[...],
                  preferred_element_type=jnp.float32)              # (1, F)
    tfused = feats * w_t

    # sub branch
    slog = jnp.dot(tfused, wsT_ref[...],
                   preferred_element_type=jnp.float32) + bs_ref[...]
    sprobs = _softmax_rows(slog)
    w_s = jnp.dot(jnp.sum(sprobs, axis=0, keepdims=True), ws_ref[...],
                  preferred_element_type=jnp.float32)
    # NOTE: the module fuses with `features` (not tfused) here — keep the bug.
    sfused = feats * w_s

    # super branch
    plog = jnp.dot(sfused, wpT_ref[...],
                   preferred_element_type=jnp.float32) + bp_ref[...]

    # one lane-dense (B, 3*128) slab -> unmasked vst, single writeback DMA
    out_ref[:, 0 * _LANE:1 * _LANE] = tlog
    out_ref[:, 1 * _LANE:2 * _LANE] = slog
    out_ref[:, 2 * _LANE:3 * _LANE] = plog


# ---------------------------------------------------------------------------
# Host-side helpers.
# ---------------------------------------------------------------------------
def _pick_spatial_tile(p_total, num_features, max_tile=2048):
    """Largest lane-aligned spatial tile dividing P with a bounded (tp, F)
    f32 matmul intermediate."""
    if p_total % _LANE != 0:
        return p_total                 # full-extent block is always legal
    budget_rows = max(_LANE, (8 * 1024 * 1024) // (max(num_features, 1) * 4))
    tp = min(p_total, max_tile, (budget_rows // _LANE) * _LANE)
    tp = max(tp, _LANE)
    while p_total % tp != 0:
        tp -= _LANE
    return tp


def _pad_head(w, b, num_features, need_rowpad):
    """(K, F) weight / (K,) bias -> (F, 128) col-padded-transposed,
    optional (128, F) row-padded, and (1, 128) bias (-1e30 in pad lanes)."""
    k = w.shape[0]
    assert k <= _LANE, "classifier wider than 128 classes needs lane tiling"
    w = jnp.asarray(w, jnp.float32)
    w_colpad = jnp.zeros((num_features, _LANE), jnp.float32).at[:, :k].set(w.T)
    b_pad = jnp.full((1, _LANE), _NEG_INF, jnp.float32)
    b_pad = b_pad.at[0, :k].set(jnp.asarray(b, jnp.float32))
    w_rowpad = None
    if need_rowpad:
        w_rowpad = jnp.zeros((_LANE, num_features), jnp.float32).at[:k, :].set(w)
    return w_colpad, w_rowpad, b_pad


def asn_upside_down_forward(x_nchw, params, *, max_spatial_tile=2048,
                            stream_dtype=jnp.float32):
    """Returns (target_logits, sub_logits, super_logits)."""
    B, C, H, W = x_nchw.shape
    P = H * W
    F = params["stem_w"].shape[1]
    T = params["w_t"].shape[0]
    S = params["w_sub"].shape[0]
    U = params["w_super"].shape[0]

    # Native NCHW layout -> (B, C, H*W) is a free reshape (no transpose pass).
    # stream_dtype=jnp.bfloat16 halves x HBM traffic (f32 MXU accumulation).
    x = x_nchw.reshape(B, C, P).astype(stream_dtype)
    stem_w = jnp.asarray(params["stem_w"], stream_dtype)           # (C, F)
    stem_b = jnp.asarray(params["stem_b"], jnp.float32).reshape(1, F)

    tp = _pick_spatial_tile(P, F, max_spatial_tile)
    n_p = P // tp

    # ---- backbone: pooled (B, 1, F) features -------------------------------
    feats = pl.pallas_call(
        functools.partial(_backbone_kernel, inv_pool=1.0 / float(P)),
        out_shape=jax.ShapeDtypeStruct((B, 1, F), jnp.float32),
        grid_spec=pltpu.PrefetchScalarGridSpec(
            num_scalar_prefetch=0,
            grid=(B, n_p),
            in_specs=[
                # channels on sublanes, spatial on lanes
                pl.BlockSpec((None, C, tp), lambda b, p: (b, 0, p)),
                pl.BlockSpec((C, F), lambda b, p: (0, 0)),
                pl.BlockSpec((1, F), lambda b, p: (0, 0)),
            ],
            out_specs=pl.BlockSpec((None, 1, F), lambda b, p: (b, 0, 0)),
        ),
        compiler_params=pltpu.CompilerParams(
            # batch parallel (uses both TCs on v7x), spatial is the reduction
            dimension_semantics=("parallel", "arbitrary"),
            vmem_limit_bytes=_VMEM_LIMIT),
    )(x, stem_w, stem_b)

    feats2d = feats.reshape(B, F)

    # ---- ASN-U head ---------------------------------------------------------
    wtT, wt, bt = _pad_head(params["w_t"], params["b_t"], F, True)
    wsT, ws, bs = _pad_head(params["w_sub"], params["b_sub"], F, True)
    wpT, _, bp = _pad_head(params["w_super"], params["b_super"], F, False)

    rep = lambda i: (0, 0)
    out = pl.pallas_call(
        _head_kernel,
        out_shape=jax.ShapeDtypeStruct((B, 3 * _LANE), jnp.float32),
        grid_spec=pltpu.PrefetchScalarGridSpec(
            num_scalar_prefetch=0,
            grid=(1,),
            in_specs=[
                pl.BlockSpec((B, F), rep),
                pl.BlockSpec((F, _LANE), rep),
                pl.BlockSpec((_LANE, F), rep),
                pl.BlockSpec((1, _LANE), rep),
                pl.BlockSpec((F, _LANE), rep),
                pl.BlockSpec((_LANE, F), rep),
                pl.BlockSpec((1, _LANE), rep),
                pl.BlockSpec((F, _LANE), rep),
                pl.BlockSpec((1, _LANE), rep),
            ],
            out_specs=pl.BlockSpec((B, 3 * _LANE), rep),
        ),
        compiler_params=pltpu.CompilerParams(
            dimension_semantics=("arbitrary",)),
    )(feats2d, wtT, wt, bt, wsT, ws, bs, wpT, bp)

    return (out[:, :T],
            out[:, _LANE:_LANE + S],
            out[:, 2 * _LANE:2 * _LANE + U])


# ----------------------------------------------------------------------------
# Pure-JAX reference of the same math (sanity check of the kernels).
# ----------------------------------------------------------------------------
def _reference(x_nchw, params):
    B, C, H, W = x_nchw.shape
    x = x_nchw.reshape(B, C, H * W)
    y = jnp.maximum(jnp.einsum("bcp,cf->bpf", x, params["stem_w"])
                    + params["stem_b"][None, None, :], 0.0)
    feats = jnp.mean(y, axis=1)

    tlog = feats @ params["w_t"].T + params["b_t"]
    tpb = jax.nn.softmax(tlog, axis=1)
    W_t = jnp.sum(tpb @ params["w_t"], axis=0)
    tff = feats * W_t
    slog = tff @ params["w_sub"].T + params["b_sub"]
    sp = jax.nn.softmax(slog, axis=1)
    W_sub = jnp.sum(sp @ params["w_sub"], axis=0)
    sff = feats * W_sub
    plog = sff @ params["w_super"].T + params["b_super"]
    return tlog, slog, plog


if __name__ == "__main__":
    # Small, module-consistent shapes.
    B, C, H, W = 2, 4, 16, 16          # input image batch (NCHW)
    F = 32                              # num_features (ResNet-50 uses 2048)
    NUM_SUPER, NUM_SUB, NUM_TARGET = 3, 6, 10

    key = jax.random.PRNGKey(0)
    ks = jax.random.split(key, 8)
    params = {
        "stem_w":  0.2 * jax.random.normal(ks[0], (C, F), jnp.float32),
        "stem_b":  0.1 * jax.random.normal(ks[1], (F,), jnp.float32),
        "w_t":     0.1 * jax.random.normal(ks[2], (NUM_TARGET, F), jnp.float32),
        "b_t":     0.1 * jax.random.normal(ks[3], (NUM_TARGET,), jnp.float32),
        "w_sub":   0.1 * jax.random.normal(ks[4], (NUM_SUB, F), jnp.float32),
        "b_sub":   0.1 * jax.random.normal(ks[5], (NUM_SUB,), jnp.float32),
        "w_super": 0.1 * jax.random.normal(ks[6], (NUM_SUPER, F), jnp.float32),
        "b_super": 0.1 * jax.random.normal(ks[7], (NUM_SUPER,), jnp.float32),
    }
    x = jax.random.normal(jax.random.PRNGKey(42), (B, C, H, W), jnp.float32)

    # max_spatial_tile=128 forces a 2-step spatial reduction so the resident
    # accumulator path (init / accumulate / finalize) is exercised.
    target_logits, sub_logits, super_logits = jax.block_until_ready(
        asn_upside_down_forward(x, params, max_spatial_tile=128))

    ref_t, ref_s, ref_p = _reference(x, params)
    assert target_logits.shape == (B, NUM_TARGET)
    assert sub_logits.shape == (B, NUM_SUB)
    assert super_logits.shape == (B, NUM_SUPER)
    assert jnp.allclose(target_logits, ref_t, rtol=1e-3, atol=1e-3)
    assert jnp.allclose(sub_logits, ref_s, rtol=1e-3, atol=1e-3)
    assert jnp.allclose(super_logits, ref_p, rtol=1e-3, atol=1e-3)

    print("KERNEL_OK")
</pallas_src>

<mosaic_0001>
module attributes {stable_mosaic.version = 11 : i64} {
  func.func @_backbone_kernel(%arg0: i32, %arg1: i32, %arg2: memref<1x4x128xf32, #tpu.memory_space<vmem>>, %arg3: memref<4x32xf32, #tpu.memory_space<vmem>>, %arg4: memref<1x32xf32, #tpu.memory_space<vmem>>, %arg5: memref<1x1x32xf32, #tpu.memory_space<vmem>>) attributes {dimension_semantics = [#tpu.dimension_semantics<parallel>, #tpu.dimension_semantics<arbitrary>], iteration_bounds = array<i64: 2, 2>, scalar_prefetch = 0 : i64, scratch_operands = 0 : i64, tpu.core_type = #tpu.core_type<tc>, window_params = [{transform_indices = @transform_0, window_bounds = array<i64: 1, 4, 128>}, {pipeline_mode = #tpu.pipeline_mode<synchronous>, transform_indices = @transform_1, window_bounds = array<i64: 4, 32>}, {pipeline_mode = #tpu.pipeline_mode<synchronous>, transform_indices = @transform_2, window_bounds = array<i64: 1, 32>}, {transform_indices = @transform_3, window_bounds = array<i64: 1, 1, 32>}]} {
    %c0_i32 = arith.constant 0 : i32
    %0 = arith.cmpi eq, %arg1, %c0_i32 : i32
    %1 = arith.extui %0 : i1 to i32
    %c0_i32_0 = arith.constant 0 : i32
    %2 = arith.cmpi ne, %1, %c0_i32_0 : i32
    scf.if %2 {
      %cst_16 = arith.constant 0.000000e+00 : f32
      %23 = vector.broadcast %cst_16 : f32 to vector<1x32xf32>
      %c0_17 = arith.constant 0 : index
      %c0_18 = arith.constant 0 : index
      %c0_19 = arith.constant 0 : index
      %24 = vector.load %arg5[%c0_17, %c0_18, %c0_19] : memref<1x1x32xf32, #tpu.memory_space<vmem>>, vector<1x1x32xf32>
      %25 = vector.shape_cast %24 : vector<1x1x32xf32> to vector<1x32xf32>
      %26 = vector.shape_cast %23 : vector<1x32xf32> to vector<1x1x32xf32>
      tpu.vector_store %arg5[%c0_17, %c0_18, %c0_19], %26 {strides = array<i32>} : memref<1x1x32xf32, #tpu.memory_space<vmem>>, vector<1x1x32xf32>,
    } else {
    }
    %c0 = arith.constant 0 : index
    %c0_1 = arith.constant 0 : index
    %c0_2 = arith.constant 0 : index
    %3 = vector.load %arg2[%c0, %c0_1, %c0_2] : memref<1x4x128xf32, #tpu.memory_space<vmem>>, vector<1x4x128xf32>
    %4 = vector.shape_cast %3 : vector<1x4x128xf32> to vector<4x128xf32>
    %c0_3 = arith.constant 0 : index
    %c0_4 = arith.constant 0 : index
    %5 = vector.load %arg3[%c0_3, %c0_4] : memref<4x32xf32, #tpu.memory_space<vmem>>, vector<4x32xf32>
    %cst = arith.constant dense<0.000000e+00> : vector<128x32xf32>
    %6 = tpu.matmul %4, %5, %cst {dimension_numbers = #tpu.dot_dimension_numbers<[0], [0], [1], [1], [0, 1, 1, 1], [], []>} : vector<4x128xf32>, vector<4x32xf32>, vector<128x32xf32> -> vector<128x32xf32>
    %c0_5 = arith.constant 0 : index
    %c0_6 = arith.constant 0 : index
    %7 = vector.load %arg4[%c0_5, %c0_6] : memref<1x32xf32, #tpu.memory_space<vmem>>, vector<1x32xf32>
    %8 = vector.broadcast %7 : vector<1x32xf32> to vector<128x32xf32>
    %9 = arith.addf %6, %8 : vector<128x32xf32>
    %cst_7 = arith.constant 0.000000e+00 : f32
    %10 = vector.broadcast %cst_7 : f32 to vector<128x32xf32>
    %11 = arith.maximumf %9, %10 : vector<128x32xf32>
    %c0_8 = arith.constant 0 : index
    %c0_9 = arith.constant 0 : index
    %c0_10 = arith.constant 0 : index
    %12 = vector.load %arg5[%c0_8, %c0_9, %c0_10] : memref<1x1x32xf32, #tpu.memory_space<vmem>>, vector<1x1x32xf32>
    %13 = vector.shape_cast %12 : vector<1x1x32xf32> to vector<1x32xf32>
    %cst_11 = arith.constant dense<0.000000e+00> : vector<32xf32>
    %14 = vector.multi_reduction <add>, %11, %cst_11 [0] : vector<128x32xf32> to vector<32xf32>
    %15 = vector.shape_cast %14 : vector<32xf32> to vector<1x32xf32>
    %16 = arith.addf %13, %15 : vector<1x32xf32>
    %c0_12 = arith.constant 0 : index
    %c0_13 = arith.constant 0 : index
    %c0_14 = arith.constant 0 : index
    %17 = vector.load %arg5[%c0_12, %c0_13, %c0_14] : memref<1x1x32xf32, #tpu.memory_space<vmem>>, vector<1x1x32xf32>
    %18 = vector.shape_cast %17 : vector<1x1x32xf32> to vector<1x32xf32>
    %19 = vector.shape_cast %16 : vector<1x32xf32> to vector<1x1x32xf32>
    tpu.vector_store %arg5[%c0_12, %c0_13, %c0_14], %19 {strides = array<i32>} : memref<1x1x32xf32, #tpu.memory_space<vmem>>, vector<1x1x32xf32>,
    %c1_i32 = arith.constant 1 : i32
    %20 = arith.cmpi eq, %arg1, %c1_i32 : i32
    %21 = arith.extui %20 : i1 to i32
    %c0_i32_15 = arith.constant 0 : i32
    %22 = arith.cmpi ne, %21, %c0_i32_15 : i32
    scf.if %22 {
      %c0_16 = arith.constant 0 : index
      %c0_17 = arith.constant 0 : index
      %c0_18 = arith.constant 0 : index
      %23 = vector.load %arg5[%c0_16, %c0_17, %c0_18] : memref<1x1x32xf32, #tpu.memory_space<vmem>>, vector<1x1x32xf32>
      %24 = vector.shape_cast %23 : vector<1x1x32xf32> to vector<1x32xf32>
      %cst_19 = arith.constant 3.906250e-03 : f32
      %25 = vector.broadcast %cst_19 : f32 to vector<1x32xf32>
      %26 = arith.mulf %24, %25 : vector<1x32xf32>
      %c0_20 = arith.constant 0 : index
      %c0_21 = arith.constant 0 : index
      %c0_22 = arith.constant 0 : index
      %27 = vector.load %arg5[%c0_20, %c0_21, %c0_22] : memref<1x1x32xf32, #tpu.memory_space<vmem>>, vector<1x1x32xf32>
      %28 = vector.shape_cast %27 : vector<1x1x32xf32> to vector<1x32xf32>
      %29 = vector.shape_cast %26 : vector<1x32xf32> to vector<1x1x32xf32>
      tpu.vector_store %arg5[%c0_20, %c0_21, %c0_22], %29 {strides = array<i32>} : memref<1x1x32xf32, #tpu.memory_space<vmem>>, vector<1x1x32xf32>,
    } else {
    }
    return
  }
  func.func @transform_0(%arg0: i32, %arg1: i32) -> (i32, i32, i32) {
    %c0_i32 = arith.constant 0 : i32
    %c0_i32_0 = arith.constant 0 : i32
    return %arg0, %c0_i32, %arg1 : i32, i32, i32
  }
  func.func @transform_1(%arg0: i32, %arg1: i32) -> (i32, i32) {
    %c0_i32 = arith.constant 0 : i32
    %c0_i32_0 = arith.constant 0 : i32
    %c0_i32_1 = arith.constant 0 : i32
    return %c0_i32, %c0_i32_0 : i32, i32
  }
  func.func @transform_2(%arg0: i32, %arg1: i32) -> (i32, i32) {
    %c0_i32 = arith.constant 0 : i32
    %c0_i32_0 = arith.constant 0 : i32
    %c0_i32_1 = arith.constant 0 : i32
    return %c0_i32, %c0_i32_0 : i32, i32
  }
  func.func @transform_3(%arg0: i32, %arg1: i32) -> (i32, i32, i32) {
    %c0_i32 = arith.constant 0 : i32
    %c0_i32_0 = arith.constant 0 : i32
    %c0_i32_1 = arith.constant 0 : i32
    return %arg0, %c0_i32, %c0_i32_0 : i32, i32, i32
  }
}

</mosaic_0001>

<llo_original>
// kernel: tpu_custom_call.1
$region0: #{tpu_custom_call.1}
  #allocation0 [shape = 'u32[]', space=smem, size = 0x4, offset = 0x4, fixed_abs, tag = 'smem constant byte address 0x4 - core index']
  #allocation1 [shape = 'u32[144,128]{1,0:T(1,128)}', space=vmem, size = 0x12000, scoped, tag = 'internal scratch']
  %s0 = inlined_call_operand.hbm [shape: f32[2,4,256], index: 0, kind: input, shape index: {}]
  %s1 = inlined_call_operand.hbm [shape: f32[4,32], index: 1, kind: input, shape index: {}]
  %s2 = inlined_call_operand.vmem [shape: f32[1,32], index: 2, kind: input, shape index: {}]
  %s3 = inlined_call_operand.hbm [shape: f32[2,1,32], index: 3, kind: output, shape index: {}]
  %s4 = sld [smem:[#allocation0]]
  $region61: #{tpu_custom_call.1} parent=0
    _
  %s6 = ssub.s32 1, %s4
  %s7 = scalar_select 0, %s6, %s4
  $region1: #{tpu_custom_call.1} parent=0
    #allocation2 [shape = 'u8[4096]{0}', space=vmem, size = 0x1000, scoped, tag = 'input window, operand 0']
    #allocation3 [shape = 's32[2]{0}', space=sflag, size = 0x8, scoped, tag = 'scoped memory for tpu_custom_call.1']
    #allocation4 [shape = 's32[2]{0}', space=sflag, size = 0x8, scoped, tag = 'scoped memory for tpu_custom_call.1']
    #allocation5 [shape = 'u8[2048]{0}', space=vmem, size = 0x800, scoped, tag = 'input window, operand 1, single buffered']
    #allocation6 [shape = 's32[1]{0}', space=sflag, size = 0x4, scoped, tag = 'scoped memory for tpu_custom_call.1']
    #allocation7 [shape = 'u8[1024]{0}', space=vmem, size = 0x400, scoped, tag = 'output window, operand 0']
    %8 = vsyncpa [#allocation3], 0
    %s9 = scalar_lea.sflag [#allocation3], 1
    %10 = vsyncpa %s9, 0
    %11 = vsyncpa [#allocation6], 0
    %12 = vsyncpa [#allocation4], 0
    %s13 = scalar_lea.sflag [#allocation4], 1
    %14 = vsyncpa %s13, 0
    loop: start=0, step=1, limit=6
    $region2: #{tpu_custom_call.1} parent=1 // loop_pre_header
      _
    $region3: #{tpu_custom_call.1} parent=1 // loop_header
      %s16 = sphi 0, %s20
      %p17 = scmp.ge.s32.totalorder %s16, 6
      %s23 = sphi 0, %s35
      %s24 = sphi 0, %s31
      %s25 = sphi 0, %s23
      %s26 = sphi 0, %s24
      %s27 = sphi 0, %s25
      %s28 = sphi 0, %s26
      %s40 = sphi 0, %s42
      %s43 = sphi 0, %s40
      %s44 = sphi 0, %s43
      %s60 = sphi 0, %s44
      %s64 = sphi 0, %s64
      %s66 = sphi 0, %s64
      %s67 = sphi 0, %s66
      %s81 = sphi 0, %s67
      %s85 = sphi 0, %s85
      %s87 = sphi 0, %s85
      %s88 = sphi 0, %s87
      %s102 = sphi 0, %s88
      %s108 = sphi 0, %s110
      %s111 = sphi 0, %s108
      %s112 = sphi 0, %s111
      %s128 = sphi 0, %s112
    $region4: #{tpu_custom_call.1} parent=1 // loop_header_branch
      %19 = sbr.rel (%p17) target = $region8
    $region5: #{tpu_custom_call.1} parent=1 // loop_body
      %s21 = ssub.s32 %s16, 1
      %s22 = ssub.s32 %s16, 2
      %s29 = sadd.s32 1, %s24
      %p30 = scmp.ge.s32.totalorder %s29, 2
      %s31 = scalar_select %p30, 0, %s29
      %s32 = sadd.s32 1, %s23
      %s33 = scalar_select %p30, %s32, %s23
      %p34 = scmp.ge.s32.totalorder %s33, 2
      %s35 = scalar_select %p34, 0, %s33
      %s36 = ssub.s32 %s23, %s35
      %s37 = ssub.s32 %s24, %s31
      %s38 = sor.u32 %s36, %s37
      %p39 = scmp.eq.s32.totalorder %s38, 0
      %s41 = sadd.s32 %s40, 1
      %s42 = scalar_select %p39, %s40, %s41
      %p45 = pneg %p39
      %p46 = scmp.eq.s32.totalorder %s16, 3
      %p47 = por %p45, %p46
      %p48 = scmp.ne.s32.totalorder %s40, %s43
      %p49 = scmp.eq.s32.totalorder %s16, 0
      %p50 = por %p48, %p49
      %p51 = scmp.ne.s32.totalorder %s40, %s43
      %p52 = scmp.eq.s32.totalorder %s21, 3
      %p53 = por %p51, %p52
      %p54 = scmp.ne.s32.totalorder %s43, %s44
      %p55 = scmp.eq.s32.totalorder %s21, 0
      %p56 = por %p54, %p55
      %p57 = scmp.ne.s32.totalorder %s43, %s44
      %p58 = scmp.eq.s32.totalorder %s22, 3
      %p59 = por %p57, %p58
      %p61 = scmp.ne.s32.totalorder %s44, %s60
      %p62 = scmp.eq.s32.totalorder %s22, 0
      %p63 = por %p61, %p62
      %s65 = sadd.s32 %s64, 1
      %p68 = scmp.eq.s32.totalorder %s16, 3
      %p69 = scmp.ne.s32.totalorder %s64, %s66
      %p70 = scmp.eq.s32.totalorder %s16, 0
      %p71 = por %p69, %p70
      %p72 = scmp.ne.s32.totalorder %s64, %s66
      %p73 = scmp.eq.s32.totalorder %s21, 3
      %p74 = por %p72, %p73
      %p75 = scmp.ne.s32.totalorder %s66, %s67
      %p76 = scmp.eq.s32.totalorder %s21, 0
      %p77 = por %p75, %p76
      %p78 = scmp.ne.s32.totalorder %s66, %s67
      %p79 = scmp.eq.s32.totalorder %s22, 3
      %p80 = por %p78, %p79
      %p82 = scmp.ne.s32.totalorder %s67, %s81
      %p83 = scmp.eq.s32.totalorder %s22, 0
      %p84 = por %p82, %p83
      %s86 = sadd.s32 %s85, 1
      %p89 = scmp.eq.s32.totalorder %s16, 3
      %p90 = scmp.ne.s32.totalorder %s85, %s87
      %p91 = scmp.eq.s32.totalorder %s16, 0
      %p92 = por %p90, %p91
      %p93 = scmp.ne.s32.totalorder %s85, %s87
      %p94 = scmp.eq.s32.totalorder %s21, 3
      %p95 = por %p93, %p94
      %p96 = scmp.ne.s32.totalorder %s87, %s88
      %p97 = scmp.eq.s32.totalorder %s21, 0
      %p98 = por %p96, %p97
      %p99 = scmp.ne.s32.totalorder %s87, %s88
      %p100 = scmp.eq.s32.totalorder %s22, 3
      %p101 = por %p99, %p100
      %p103 = scmp.ne.s32.totalorder %s88, %s102
      %p104 = scmp.eq.s32.totalorder %s22, 0
      %p105 = por %p103, %p104
      %s106 = ssub.s32 %s23, %s35
      %p107 = scmp.eq.s32.totalorder %s106, 0
      %s109 = sadd.s32 %s108, 1
      %s110 = scalar_select %p107, %s108, %s109
      %p113 = pneg %p107
      %p114 = scmp.eq.s32.totalorder %s16, 3
      %p115 = por %p113, %p114
      %p116 = scmp.ne.s32.totalorder %s108, %s111
      %p117 = scmp.eq.s32.totalorder %s16, 0
      %p118 = por %p116, %p117
      %p119 = scmp.ne.s32.totalorder %s108, %s111
      %p120 = scmp.eq.s32.totalorder %s21, 3
      %p121 = por %p119, %p120
      %p122 = scmp.ne.s32.totalorder %s111, %s112
      %p123 = scmp.eq.s32.totalorder %s21, 0
      %p124 = por %p122, %p123
      %p125 = scmp.ne.s32.totalorder %s111, %s112
      %p126 = scmp.eq.s32.totalorder %s22, 3
      %p127 = por %p125, %p126
      %p129 = scmp.ne.s32.totalorder %s112, %s128
      %p130 = scmp.eq.s32.totalorder %s22, 0
      %p131 = por %p129, %p130
      %p132 = scmp.le.s32.totalorder 1, %s16
      %p133 = scmp.lt.s32.totalorder %s16, 5
      %p134 = pnand %p132, %p133
      %p135 = pneg %p134
      // Predicated region
      $region9: #{tpu_custom_call.1} parent=5 // pred_check
        _
      $region10: #{tpu_custom_call.1} parent=5 // pred_check_branch
        %137 = sbr.rel (%p134) target = $region12
      $region11: #{tpu_custom_call.1} parent=5 // pred_region
        %s138 = ssub.s32 %s16, 1
        // Predicated region
        $region13: #{tpu_custom_call.1} parent=11 // pred_check
          %p139 = pneg %p77
        $region14: #{tpu_custom_call.1} parent=11 // pred_check_branch
          %141 = sbr.rel (%p139) target = $region16
        $region15: #{tpu_custom_call.1} parent=11 // pred_region
          %s143 = ssub.s32 64, 64
          %144 = vsyncadd [#allocation6], %s143
          %s146 = sshll.u32 [#allocation5], 4
          %s147 = int_to_ptr.vmem [resolvable:$true] %s146
          %149 = dma.hbm_to_vmem [thread:$0]  %s1, 64, %s147, [#allocation6]
        $region16: #{tpu_custom_call.1} parent=11 // pred_fallthru
          _
        // Predicated region
        $region17: #{tpu_custom_call.1} parent=11 // pred_check
          %p150 = pneg %p98
        $region18: #{tpu_custom_call.1} parent=11 // pred_check_branch
          %152 = sbr.rel (%p150) target = $region20
        $region19: #{tpu_custom_call.1} parent=11 // pred_region
          _
        $region20: #{tpu_custom_call.1} parent=11 // pred_fallthru
          _
      $region12: #{tpu_custom_call.1} parent=5 // pred_fallthru
        _
      %p153 = scmp.lt.s32.totalorder %s16, 4
      // Predicated region
      $region21: #{tpu_custom_call.1} parent=5 // pred_check
        %p154 = pneg %p153
      $region22: #{tpu_custom_call.1} parent=5 // pred_check_branch
        %156 = sbr.rel (%p154) target = $region24
      $region23: #{tpu_custom_call.1} parent=5 // pred_region
        // Predicated region
        $region25: #{tpu_custom_call.1} parent=23 // pred_check
          %p157 = pneg %p50
        $region26: #{tpu_custom_call.1} parent=23 // pred_check_branch
          %159 = sbr.rel (%p157) target = $region28
        $region27: #{tpu_custom_call.1} parent=23 // pred_region
          %s160 = sand.u32 %s40, 1
          %s161 = scalar_lea.sflag [#allocation3], %s160
          %s162 = sand.u32 %s40, 1
          %s163 = smul.addr %s162, 4
          %s164 = scalar_lea.vmem [#allocation2], %s163
          %s166 = ssub.s32 64, 64
          %167 = vsyncadd %s161, %s166
          %s168 = smul.addr %s23, 2
          %s169 = sadd.s32 %s24, %s168
          %s170 = smul.addr %s169, 64
          %s171 = scalar_lea.hbm %s0, %s170
          %s173 = sshll.u32 %s164, 4
          %s174 = int_to_ptr.vmem [resolvable:$true] %s173
          %176 = dma.hbm_to_vmem [thread:$0]  %s171, 64, %s174, %s161
        $region28: #{tpu_custom_call.1} parent=23 // pred_fallthru
          _
      $region24: #{tpu_custom_call.1} parent=5 // pred_fallthru
        _
      %p177 = scmp.le.s32.totalorder 1, %s16
      %p178 = scmp.lt.s32.totalorder %s16, 5
      %p179 = pnand %p177, %p178
      %p180 = pneg %p179
      // Predicated region
      $region29: #{tpu_custom_call.1} parent=5 // pred_check
        _
      $region30: #{tpu_custom_call.1} parent=5 // pred_check_branch
        %182 = sbr.rel (%p179) target = $region32
      $region31: #{tpu_custom_call.1} parent=5 // pred_region
        %s183 = ssub.s32 %s16, 1
        %s184 = sand.u32 %s43, 1
        %s185 = scalar_lea.sflag [#allocation3], %s184
        %s186 = sand.u32 %s43, 1
        %s187 = smul.addr %s186, 4
        %s188 = scalar_lea.vmem [#allocation2], %s187
        // Predicated region
        $region33: #{tpu_custom_call.1} parent=31 // pred_check
          %p189 = pneg %p56
        $region34: #{tpu_custom_call.1} parent=31 // pred_check_branch
          %191 = sbr.rel (%p189) target = $region36
        $region35: #{tpu_custom_call.1} parent=31 // pred_region
          %192 = dma.done %s185, 64
        $region36: #{tpu_custom_call.1} parent=31 // pred_fallthru
          _
        // Predicated region
        $region37: #{tpu_custom_call.1} parent=31 // pred_check
          %p193 = pneg %p77
        $region38: #{tpu_custom_call.1} parent=31 // pred_check_branch
          %195 = sbr.rel (%p193) target = $region40
        $region39: #{tpu_custom_call.1} parent=31 // pred_region
          %196 = dma.done [#allocation6], 64
        $region40: #{tpu_custom_call.1} parent=31 // pred_fallthru
          _
        %s197 = sand.u32 %s43, 1
        %s198 = scalar_lea.sflag [#allocation3], %s197
        %s199 = sand.u32 %s43, 1
        %s200 = smul.addr %s199, 4
        %s201 = scalar_lea.vmem [#allocation2], %s200
        %p202 = pneg %p56
        %p203 = pneg %p53
        %p204 = pneg %p77
        %p205 = pneg %p74
        %p206 = pneg %p98
        %p207 = pneg %p95
        %p208 = pneg %p124
        %p209 = pneg %p121
        %s210 = sand.u32 %s111, 1
        %s211 = scalar_lea.sflag [#allocation4], %s210
        %s212 = sand.u32 %s111, 1
        %s213 = scalar_lea.vmem [#allocation7], %s212
        %p214 = scmp.eq.s32.totalorder %s26, 0
        // Predicated region
        $region41: #{tpu_custom_call.1} parent=31 // pred_check
          %p215 = pneg %p214
        $region42: #{tpu_custom_call.1} parent=31 // pred_check_branch
          %217 = sbr.rel (%p215) target = $region44
        $region43: #{tpu_custom_call.1} parent=31 // pred_region
          %vm218 = vcmask 253952
          %219 = vst.msk [vmem:[%s213] sm:$0x1] %vm218, 0.0
        $region44: #{tpu_custom_call.1} parent=31 // pred_fallthru
          _
        %v220 = vld [vmem:[%s188] sm:$0xf]
        %v221 = vld [vmem:[#allocation5] sm:$0xf]
        %v222 = vld [vmem:[%s2] sm:$0x1]
        %v224 = vlaneseq
        %v225 = vshrl.u32 %v224, 7
        %v226 = vsub.s32 0, %v225
        %v227 = vrot.slane %v222, %v226
        %229 = vxpose.xlu0.b32.start [1/16] %v220, 128
        %230 = vxpose.xlu0.b32.cont [2/16] 0.0, 128
        %231 = vxpose.xlu0.b32.cont [3/16] 0.0, 128
        %232 = vxpose.xlu0.b32.cont [4/16] 0.0, 128
        %233 = vxpose.xlu0.b32.cont [5/16] 0.0, 128
        %234 = vxpose.xlu0.b32.cont [6/16] 0.0, 128
        %235 = vxpose.xlu0.b32.cont [7/16] 0.0, 128
        %236 = vxpose.xlu0.b32.cont [8/16] 0.0, 128
        %237 = vxpose.xlu0.b32.cont [9/16] 0.0, 128
        %238 = vxpose.xlu0.b32.cont [10/16] 0.0, 128
        %239 = vxpose.xlu0.b32.cont [11/16] 0.0, 128
        %240 = vxpose.xlu0.b32.cont [12/16] 0.0, 128
        %241 = vxpose.xlu0.b32.cont [13/16] 0.0, 128
        %242 = vxpose.xlu0.b32.cont [14/16] 0.0, 128
        %243 = vxpose.xlu0.b32.cont [15/16] 0.0, 128
        %244 = vxpose.xlu0.b32.end [16/16] 0.0, 128
        %v245 = vpop.trf.xlu0
        %v246 = vpop.trf.xlu0
        %v247 = vpop.trf.xlu0
        %v248 = vpop.trf.xlu0
        %v249 = vpop.trf.xlu0
        %v250 = vpop.trf.xlu0
        %v251 = vpop.trf.xlu0
        %v252 = vpop.trf.xlu0
        %v253 = vpop.trf.xlu0
        %v254 = vpop.trf.xlu0
        %v255 = vpop.trf.xlu0
        %v256 = vpop.trf.xlu0
        %v257 = vpop.trf.xlu0
        %v258 = vpop.trf.xlu0
        %v259 = vpop.trf.xlu0
        %v260 = vpop.trf.xlu0
        %vm261 = vcmask 31744
        %v263 = vsel %vm261, %v245, 0
        %v266 = vsel %vm261, %v246, 0
        %v269 = vsel %vm261, %v247, 0
        %v272 = vsel %vm261, %v248, 0
        %v275 = vsel %vm261, %v249, 0
        %v278 = vsel %vm261, %v250, 0
        %v281 = vsel %vm261, %v251, 0
        %v284 = vsel %vm261, %v252, 0
        %v287 = vsel %vm261, %v253, 0
        %v290 = vsel %vm261, %v254, 0
        %v293 = vsel %vm261, %v255, 0
        %v296 = vsel %vm261, %v256, 0
        %v299 = vsel %vm261, %v257, 0
        %v302 = vsel %vm261, %v258, 0
        %v305 = vsel %vm261, %v259, 0
        %v308 = vsel %vm261, %v260, 0
        %vm310 = vcmask 1043456
        %v312 = vsel %vm310, %v221, 0
        %314 = vmatprep.subr.mxu0 0.0
        %315 = vmatpush1.msra.mxu0 %v312
        %316 = vmatprep.subr.mxu0 0.0
        %317 = vmatpush1.msra.mxu0 0.0
        %318 = vmatprep.subr.mxu0 0.0
        %319 = vmatpush1.msra.mxu0 0.0
        %320 = vmatprep.subr.mxu0 0.0
        %321 = vmatpush1.msra.mxu0 0.0
        %322 = vmatprep.subr.mxu0 0.0
        %323 = vmatpush1.msra.mxu0 0.0
        %324 = vmatprep.subr.mxu0 0.0
        %325 = vmatpush1.msra.mxu0 0.0
        %326 = vmatprep.subr.mxu0 0.0
        %327 = vmatpush1.msra.mxu0 0.0
        %328 = vmatprep.subr.mxu0 0.0
        %329 = vmatpush1.msra.mxu0 0.0
        %330 = vmatprep.subr.mxu0 0.0
        %331 = vmatpush1.msra.mxu0 0.0
        %332 = vmatprep.subr.mxu0 0.0
        %333 = vmatpush1.msra.mxu0 0.0
        %334 = vmatprep.subr.mxu0 0.0
        %335 = vmatpush1.msra.mxu0 0.0
        %336 = vmatprep.subr.mxu0 0.0
        %337 = vmatpush1.msra.mxu0 0.0
        %338 = vmatprep.subr.mxu0 0.0
        %339 = vmatpush1.msra.mxu0 0.0
        %340 = vmatprep.subr.mxu0 0.0
        %341 = vmatpush1.msra.mxu0 0.0
        %342 = vmatprep.subr.mxu0 0.0
        %343 = vmatpush1.msra.mxu0 0.0
        %344 = vmatprep.subr.mxu0 0.0
        %345 = vmatpush1.msra.mxu0 0.0
        %346 = vmatprep.subr.mxu0 0.0
        %347 = vmatpush1.msra.mxu0 0.0
        %348 = vmatprep.subr.mxu0 0.0
        %349 = vmatpush1.msra.mxu0 0.0
        %350 = vmatprep.subr.mxu0 0.0
        %351 = vmatpush1.msra.mxu0 0.0
        %352 = vmatprep.subr.mxu0 0.0
        %353 = vmatpush1.msra.mxu0 0.0
        %354 = vmatprep.subr.mxu0 0.0
        %355 = vmatpush1.msra.mxu0 0.0
        %356 = vmatprep.subr.mxu0 0.0
        %357 = vmatpush1.msra.mxu0 0.0
        %358 = vmatprep.subr.mxu0 0.0
        %359 = vmatpush1.msra.mxu0 0.0
        %360 = vmatprep.subr.mxu0 0.0
        %361 = vmatpush1.msra.mxu0 0.0
        %362 = vmatprep.subr.mxu0 0.0
        %363 = vmatpush1.msra.mxu0 0.0
        %364 = vmatprep.subr.mxu0 0.0
        %365 = vmatpush1.msra.mxu0 0.0
        %366 = vmatprep.subr.mxu0 0.0
        %367 = vmatpush1.msra.mxu0 0.0
        %368 = vmatprep.subr.mxu0 0.0
        %369 = vmatpush1.msra.mxu0 0.0
        %370 = vmatprep.subr.mxu0 0.0
        %371 = vmatpush1.msra.mxu0 0.0
        %372 = vmatprep.subr.mxu0 0.0
        %373 = vmatpush1.msra.mxu0 0.0
        %374 = vmatprep.subr.mxu0 0.0
        %375 = vmatpush1.msra.mxu0 0.0
        %376 = vmatprep.subr.mxu0 0.0
        %377 = vmatpush1.msra.mxu0 0.0
        %378 = vmatprep.mubr.f32.mxu0 0.0
        %379 = vmatmul.mubr.f32.gmra.mrb[0].mxu0 %v263
        %v380 = vpop.f32.mrb[0].mxu0
        %v381 = vadd.f32 %v227, %v380
        %v382 = vpop.f32.mrb[0].mxu0
        %383 = vmatprep.mubr.f32.mxu0 0.0
        %384 = vmatmul.mubr.f32.gmra.mrb[0].mxu0 %v266
        %v385 = vpop.f32.mrb[0].mxu0
        %v386 = vadd.f32 %v227, %v385
        %v387 = vpop.f32.mrb[0].mxu0
        %388 = vmatprep.mubr.f32.mxu0 0.0
        %389 = vmatmul.mubr.f32.gmra.mrb[0].mxu0 %v269
        %v390 = vpop.f32.mrb[0].mxu0
        %v391 = vadd.f32 %v227, %v390
        %v392 = vpop.f32.mrb[0].mxu0
        %393 = vmatprep.mubr.f32.mxu0 0.0
        %394 = vmatmul.mubr.f32.gmra.mrb[0].mxu0 %v272
        %v395 = vpop.f32.mrb[0].mxu0
        %v396 = vadd.f32 %v227, %v395
        %v397 = vpop.f32.mrb[0].mxu0
        %398 = vmatprep.mubr.f32.mxu0 0.0
        %399 = vmatmul.mubr.f32.gmra.mrb[0].mxu0 %v275
        %v400 = vpop.f32.mrb[0].mxu0
        %v401 = vadd.f32 %v227, %v400
        %v402 = vpop.f32.mrb[0].mxu0
        %403 = vmatprep.mubr.f32.mxu0 0.0
        %404 = vmatmul.mubr.f32.gmra.mrb[0].mxu0 %v278
        %v405 = vpop.f32.mrb[0].mxu0
        %v406 = vadd.f32 %v227, %v405
        %v407 = vpop.f32.mrb[0].mxu0
        %408 = vmatprep.mubr.f32.mxu0 0.0
        %409 = vmatmul.mubr.f32.gmra.mrb[0].mxu0 %v281
        %v410 = vpop.f32.mrb[0].mxu0
        %v411 = vadd.f32 %v227, %v410
        %v412 = vpop.f32.mrb[0].mxu0
        %413 = vmatprep.mubr.f32.mxu0 0.0
        %414 = vmatmul.mubr.f32.gmra.mrb[0].mxu0 %v284
        %v415 = vpop.f32.mrb[0].mxu0
        %v416 = vadd.f32 %v227, %v415
        %v417 = vpop.f32.mrb[0].mxu0
        %418 = vmatprep.mubr.f32.mxu0 0.0
        %419 = vmatmul.mubr.f32.gmra.mrb[0].mxu0 %v287
        %v420 = vpop.f32.mrb[0].mxu0
        %v421 = vadd.f32 %v227, %v420
        %v422 = vpop.f32.mrb[0].mxu0
        %423 = vmatprep.mubr.f32.mxu0 0.0
        %424 = vmatmul.mubr.f32.gmra.mrb[0].mxu0 %v290
        %v425 = vpop.f32.mrb[0].mxu0
        %v426 = vadd.f32 %v227, %v425
        %v427 = vpop.f32.mrb[0].mxu0
        %428 = vmatprep.mubr.f32.mxu0 0.0
        %429 = vmatmul.mubr.f32.gmra.mrb[0].mxu0 %v293
        %v430 = vpop.f32.mrb[0].mxu0
        %v431 = vadd.f32 %v227, %v430
        %v432 = vpop.f32.mrb[0].mxu0
        %433 = vmatprep.mubr.f32.mxu0 0.0
        %434 = vmatmul.mubr.f32.gmra.mrb[0].mxu0 %v296
        %v435 = vpop.f32.mrb[0].mxu0
        %v436 = vadd.f32 %v227, %v435
        %v437 = vpop.f32.mrb[0].mxu0
        %438 = vmatprep.mubr.f32.mxu0 0.0
        %439 = vmatmul.mubr.f32.gmra.mrb[0].mxu0 %v299
        %v440 = vpop.f32.mrb[0].mxu0
        %v441 = vadd.f32 %v227, %v440
        %v442 = vpop.f32.mrb[0].mxu0
        %443 = vmatprep.mubr.f32.mxu0 0.0
        %444 = vmatmul.mubr.f32.gmra.mrb[0].mxu0 %v302
        %v445 = vpop.f32.mrb[0].mxu0
        %v446 = vadd.f32 %v227, %v445
        %v447 = vpop.f32.mrb[0].mxu0
        %448 = vmatprep.mubr.f32.mxu0 0.0
        %449 = vmatmul.mubr.f32.gmra.mrb[0].mxu0 %v305
        %v450 = vpop.f32.mrb[0].mxu0
        %v451 = vadd.f32 %v227, %v450
        %v452 = vpop.f32.mrb[0].mxu0
        %453 = vmatprep.mubr.f32.mxu0 0.0
        %454 = vmatmul.mubr.f32.gmra.mrb[0].mxu0 %v308
        %v455 = vpop.f32.mrb[0].mxu0
        %v456 = vadd.f32 %v227, %v455
        %v457 = vpop.f32.mrb[0].mxu0
        %458 = vdwg.mxu0
        %v459 = vmax.f32 %v381, 0.0
        %v460 = vmax.f32 %v386, 0.0
        %v461 = vmax.f32 %v391, 0.0
        %v462 = vmax.f32 %v396, 0.0
        %v463 = vmax.f32 %v401, 0.0
        %v464 = vmax.f32 %v406, 0.0
        %v465 = vmax.f32 %v411, 0.0
        %v466 = vmax.f32 %v416, 0.0
        %v467 = vmax.f32 %v421, 0.0
        %v468 = vmax.f32 %v426, 0.0
        %v469 = vmax.f32 %v431, 0.0
        %v470 = vmax.f32 %v436, 0.0
        %v471 = vmax.f32 %v441, 0.0
        %v472 = vmax.f32 %v446, 0.0
        %v473 = vmax.f32 %v451, 0.0
        %v474 = vmax.f32 %v456, 0.0
        %v475 = vld [vmem:[%s213] sm:$0x1]
        %vm476 = vcmask 261120
        %v477 = vsel %vm476, %v459, 0.0
        %v478 = vsel %vm476, %v460, 0.0
        %v479 = vadd.f32 %v477, %v478
        %v480 = vsel %vm476, %v461, 0.0
        %v481 = vadd.f32 %v479, %v480
        %v482 = vsel %vm476, %v462, 0.0
        %v483 = vadd.f32 %v481, %v482
        %v484 = vsel %vm476, %v463, 0.0
        %v485 = vadd.f32 %v483, %v484
        %v486 = vsel %vm476, %v464, 0.0
        %v487 = vadd.f32 %v485, %v486
        %v488 = vsel %vm476, %v465, 0.0
        %v489 = vadd.f32 %v487, %v488
        %v490 = vsel %vm476, %v466, 0.0
        %v491 = vadd.f32 %v489, %v490
        %v492 = vsel %vm476, %v467, 0.0
        %v493 = vadd.f32 %v491, %v492
        %v494 = vsel %vm476, %v468, 0.0
        %v495 = vadd.f32 %v493, %v494
        %v496 = vsel %vm476, %v469, 0.0
        %v497 = vadd.f32 %v495, %v496
        %v498 = vsel %vm476, %v470, 0.0
        %v499 = vadd.f32 %v497, %v498
        %v500 = vsel %vm476, %v471, 0.0
        %v501 = vadd.f32 %v499, %v500
        %v502 = vsel %vm476, %v472, 0.0
        %v503 = vadd.f32 %v501, %v502
        %v504 = vsel %vm476, %v473, 0.0
        %v505 = vadd.f32 %v503, %v504
        %v506 = vsel %vm476, %v474, 0.0
        %v507 = vadd.f32 %v505, %v506
        %v508 = vrot.slane %v507, 4
        %v509 = vadd.f32 %v507, %v508
        %v510 = vrot.slane %v509, 2
        %v511 = vadd.f32 %v509, %v510
        %v512 = vrot.slane %v511, 1
        %v513 = vadd.f32 %v511, %v512
        %v514 = vadd.f32 %v475, %v513
        %vm515 = vcmask 253952
        %516 = vst.msk [vmem:[%s213] sm:$0x1] %vm515, %v514
        %p517 = scmp.eq.s32.totalorder %s26, 1
        // Predicated region
        $region45: #{tpu_custom_call.1} parent=31 // pred_check
          %p518 = pneg %p517
        $region46: #{tpu_custom_call.1} parent=31 // pred_check_branch
          %520 = sbr.rel (%p518) target = $region48
        $region47: #{tpu_custom_call.1} parent=31 // pred_region
          %v521 = vld [vmem:[%s213] sm:$0x1]
          %v522 = vmul.f32 %v521, 0.00390625
          %523 = vst.msk [vmem:[%s213] sm:$0x1] %vm515, %v522
        $region48: #{tpu_custom_call.1} parent=31 // pred_fallthru
          _
        %s524 = sand.u32 %s111, 1
        %s525 = scalar_lea.sflag [#allocation4], %s524
        %s526 = sand.u32 %s111, 1
        %s527 = scalar_lea.vmem [#allocation7], %s526
        // Predicated region
        $region49: #{tpu_custom_call.1} parent=31 // pred_check
          %p528 = pneg %p121
        $region50: #{tpu_custom_call.1} parent=31 // pred_check_branch
          %530 = sbr.rel (%p528) target = $region52
        $region51: #{tpu_custom_call.1} parent=31 // pred_region
          %s532 = ssub.s32 16, 16
          %533 = vsyncadd %s525, %s532
          %s534 = smul.addr %s25, 16
          %s535 = scalar_lea.hbm %s3, %s534
          %s537 = sshll.u32 %s527, 4
          %s538 = int_to_ptr.vmem [resolvable:$true] %s537
          %540 = dma.vmem_to_hbm [thread:$0]  %s538, 16, %s535, %s525
        $region52: #{tpu_custom_call.1} parent=31 // pred_fallthru
          _
      $region32: #{tpu_custom_call.1} parent=5 // pred_fallthru
        _
      %p541 = scmp.le.s32.totalorder 2, %s16
      // Predicated region
      $region53: #{tpu_custom_call.1} parent=5 // pred_check
        %p542 = pneg %p541
      $region54: #{tpu_custom_call.1} parent=5 // pred_check_branch
        %544 = sbr.rel (%p542) target = $region56
      $region55: #{tpu_custom_call.1} parent=5 // pred_region
        %s545 = ssub.s32 %s16, 2
        // Predicated region
        $region57: #{tpu_custom_call.1} parent=55 // pred_check
          %p546 = pneg %p127
        $region58: #{tpu_custom_call.1} parent=55 // pred_check_branch
          %548 = sbr.rel (%p546) target = $region60
        $region59: #{tpu_custom_call.1} parent=55 // pred_region
          %s549 = sand.u32 %s112, 1
          %s550 = scalar_lea.sflag [#allocation4], %s549
          %s551 = sand.u32 %s112, 1
          %s552 = scalar_lea.vmem [#allocation7], %s551
          %553 = dma.done %s550, 16
        $region60: #{tpu_custom_call.1} parent=55 // pred_fallthru
          _
      $region56: #{tpu_custom_call.1} parent=5 // pred_fallthru
        _
    $region6: #{tpu_custom_call.1} parent=1 // loop_footer
      %s20 = sadd.s32 1, %s16
    $region7: #{tpu_custom_call.1} parent=1 // loop_footer_branch
      %15 = sbr.rel target = $region3
    $region8: #{tpu_custom_call.1} parent=1 // loop_exit
      _
    %554 = vsyncpa [#allocation3], 1
    %s555 = scalar_lea.sflag [#allocation3], 1
    %556 = vsyncpa %s555, 1
    %557 = vsyncpa [#allocation6], 1
    %558 = vsyncpa [#allocation4], 1
    %s559 = scalar_lea.sflag [#allocation4], 1
    %560 = vsyncpa %s559, 1

</llo_original>
